<compile_context>
chip_gen: v6e
topology: v6e:2x2x1
jax: 0.10.0
libtpu: 0.0.40
codegen_flags: <defaults>
</compile_context>

<pallas_src>
import jax
import jax.numpy as jnp
from jax import lax
from jax.experimental import pallas as pl
from jax.experimental.pallas import tpu as pltpu


NEG_SLOPE = 0.02
IN_DIM = 1 * 4 * 4   # 16
HID = 32
OUT_DIM = 1

# --- packed parameter slab layout (all slice starts 8/16-row aligned) -------
W1_ROW = 0            # rows [0, 16)   : W1  (16, 32)
W2_ROW = 16           # rows [16, 48)  : W2  (32, 32)
W3_ROW = 48           # rows [48, 80)  : W3  (32, 32)
W4_ROW = 80           # rows [80, 96)  : W4^T in row 80, rows 81..95 zero pad
W4_PAD = 16
W_SLAB_ROWS = 96      # bf16 slab: (96, 32)

B1_ROW = 0            # row 0  : b1 (32,)
B2_ROW = 8            # row 8  : b2 (32,)
B3_ROW = 16           # row 16 : b3 (32,)
B4_ROW = 24           # row 24 : b4 scalar broadcast across the 32 lanes
B_SLAB_ROWS = 32      # f32 slab: (32, 32)


def _round_up(n, m):
    return ((n + m - 1) // m) * m


def _leaky_relu(x, slope):
    return jnp.where(x > 0, x, slope * x)


# --------------------------------------------------------------------------
# Kernel
# --------------------------------------------------------------------------
def latent_disc_kernel(x_ref, w_ref, b_ref, o_ref):
    f32 = jnp.float32
    bf16 = jnp.bfloat16

    x = x_ref[...].astype(bf16)                                   # (TILE_B, 16)

    w1 = w_ref[W1_ROW:W1_ROW + IN_DIM, :]                         # (16, 32) bf16
    w2 = w_ref[W2_ROW:W2_ROW + HID, :]                            # (32, 32) bf16
    w3 = w_ref[W3_ROW:W3_ROW + HID, :]                            # (32, 32) bf16
    w4 = w_ref[W4_ROW:W4_ROW + W4_PAD, :]                         # (16, 32) bf16, row 0 = W4^T

    b1 = b_ref[B1_ROW:B1_ROW + 1, :]                              # (1, 32) f32
    b2 = b_ref[B2_ROW:B2_ROW + 1, :]
    b3 = b_ref[B3_ROW:B3_ROW + 1, :]
    b4 = b_ref[B4_ROW:B4_ROW + 1, 0:1]                            # (1, 1)  f32

    h = jnp.dot(x, w1, preferred_element_type=f32)                # (TILE_B, 32) f32
    h = _leaky_relu(h + b1, NEG_SLOPE).astype(bf16)

    h = jnp.dot(h, w2, preferred_element_type=f32)
    h = _leaky_relu(h + b2, NEG_SLOPE).astype(bf16)

    h = jnp.dot(h, w3, preferred_element_type=f32)
    h = _leaky_relu(h + b3, NEG_SLOPE).astype(bf16)

    # Final Linear(32, 1) as an NT matmul: result rows span the batch on the
    # lane axis, so the store is lane-dense.  Rows 1..15 of w4 are zero padding.
    out_rows = lax.dot_general(
        w4, h, dimension_numbers=(((1,), (1,)), ((), ())),
        preferred_element_type=f32)                               # (16, TILE_B)
    logits = out_rows[0:1, :] + b4                                # (1, TILE_B)

    o_ref[...] = logits[None].astype(o_ref.dtype)                 # (1, 1, TILE_B)


# --------------------------------------------------------------------------
# Wrapper
# --------------------------------------------------------------------------
def latent_discriminator(x, wslab, bslab, *, tile_b=1024):
    """x: (B, 16) f32.  wslab/bslab: packed params from pack_params().

    Returns logits (B, 1) f32 (matching the PyTorch module's forward).
    """
    B = x.shape[0]
    assert x.shape[1] == IN_DIM

    tile_b = _round_up(min(tile_b, B), 8)
    num_tiles = pl.cdiv(B, tile_b)
    bp = num_tiles * tile_b
    if bp != B:
        x = jnp.pad(x, ((0, bp - B), (0, 0)))

    flops = 2 * bp * (IN_DIM * HID + HID * HID + HID * HID + HID)
    bytes_accessed = (bp * IN_DIM * 4 + bp * 4
                      + wslab.size * wslab.dtype.itemsize
                      + bslab.size * bslab.dtype.itemsize)

    out = pl.pallas_call(
        latent_disc_kernel,
        out_shape=jax.ShapeDtypeStruct((num_tiles, 1, tile_b), jnp.float32),
        grid=(num_tiles,),
        in_specs=[
            pl.BlockSpec((tile_b, IN_DIM), lambda i: (i, 0)),
            pl.BlockSpec((W_SLAB_ROWS, HID), lambda i: (0, 0)),   # VMEM-resident
            pl.BlockSpec((B_SLAB_ROWS, HID), lambda i: (0, 0)),   # VMEM-resident
        ],
        out_specs=pl.BlockSpec((1, 1, tile_b), lambda i: (i, 0, 0)),
        compiler_params=pltpu.CompilerParams(
            dimension_semantics=("parallel",)),
        cost_estimate=pl.CostEstimate(flops=flops, transcendentals=0,
                                      bytes_accessed=bytes_accessed),
    )(x, wslab, bslab)

    return out.reshape(bp, OUT_DIM)[:B]


# --------------------------------------------------------------------------
# Parameter init / packing / reference
# --------------------------------------------------------------------------
def init_params(key):
    """Same Linear shapes as the module; W stored as [in, out] (x @ W + b)."""
    ks = jax.random.split(key, 8)

    def lin(kw, kb, fan_in, fan_out):
        bound = 1.0 / jnp.sqrt(fan_in)
        w = jax.random.uniform(kw, (fan_in, fan_out), jnp.float32, -bound, bound)
        b = jax.random.uniform(kb, (1, fan_out), jnp.float32, -bound, bound)
        return w, b

    w1, b1 = lin(ks[0], ks[1], IN_DIM, HID)
    w2, b2 = lin(ks[2], ks[3], HID, HID)
    w3, b3 = lin(ks[4], ks[5], HID, HID)
    w4, b4 = lin(ks[6], ks[7], HID, OUT_DIM)
    return dict(w1=w1, b1=b1, w2=w2, b2=b2, w3=w3, b3=b3, w4=w4, b4=b4)


def pack_params(params):
    """Pack the 8 parameter arrays into a bf16 weight slab + f32 bias slab."""
    wslab = jnp.zeros((W_SLAB_ROWS, HID), jnp.bfloat16)
    wslab = wslab.at[W1_ROW:W1_ROW + IN_DIM].set(params["w1"].astype(jnp.bfloat16))
    wslab = wslab.at[W2_ROW:W2_ROW + HID].set(params["w2"].astype(jnp.bfloat16))
    wslab = wslab.at[W3_ROW:W3_ROW + HID].set(params["w3"].astype(jnp.bfloat16))
    wslab = wslab.at[W4_ROW:W4_ROW + 1].set(
        params["w4"].reshape(1, HID).astype(jnp.bfloat16))

    bslab = jnp.zeros((B_SLAB_ROWS, HID), jnp.float32)
    bslab = bslab.at[B1_ROW:B1_ROW + 1].set(params["b1"].reshape(1, HID))
    bslab = bslab.at[B2_ROW:B2_ROW + 1].set(params["b2"].reshape(1, HID))
    bslab = bslab.at[B3_ROW:B3_ROW + 1].set(params["b3"].reshape(1, HID))
    bslab = bslab.at[B4_ROW:B4_ROW + 1].set(
        jnp.broadcast_to(params["b4"].reshape(1, 1), (1, HID)))
    return wslab, bslab


def reference(x, p, *, mimic_bf16=True):
    """Pure-JAX reference.  mimic_bf16=True mirrors the kernel's bf16 matmul
    inputs with f32 accumulation; False is the exact f32 module semantics."""
    def dot(a, w):
        if mimic_bf16:
            a = a.astype(jnp.bfloat16)
            w = w.astype(jnp.bfloat16)
        return jnp.dot(a, w, preferred_element_type=jnp.float32)

    h = _leaky_relu(dot(x, p["w1"]) + p["b1"], NEG_SLOPE)
    h = _leaky_relu(dot(h, p["w2"]) + p["b2"], NEG_SLOPE)
    h = _leaky_relu(dot(h, p["w3"]) + p["b3"], NEG_SLOPE)
    return dot(h, p["w4"]) + p["b4"]


def bce_with_logits(logits, target_value):
    """Matches LatentPredictionBatch.bce_real / bce_constructed (JAX glue)."""
    t = jnp.full_like(logits, target_value)
    return jnp.mean(jnp.maximum(logits, 0) - logits * t
                    + jnp.log1p(jnp.exp(-jnp.abs(logits))))


if __name__ == "__main__":
    key = jax.random.PRNGKey(0)
    k_x, k_p = jax.random.split(key)

    params = init_params(k_p)
    wslab, bslab = pack_params(params)

    logits = None
    # 384 rows: 3 full tiles of 128.  200 rows: exercises the padded last tile.
    for batch, tile in ((384, 128), (200, 128)):
        x = jax.random.normal(jax.random.fold_in(k_x, batch),
                              (batch, IN_DIM), dtype=jnp.float32)
        logits = jax.block_until_ready(
            latent_discriminator(x, wslab, bslab, tile_b=tile))
        assert logits.shape == (batch, OUT_DIM)

        ref_bf16 = reference(x, params, mimic_bf16=True)
        ref_f32 = reference(x, params, mimic_bf16=False)
        assert jnp.allclose(logits, ref_bf16, atol=1e-3, rtol=1e-3), \
            "mismatch vs bf16-matmul reference"
        assert jnp.allclose(logits, ref_f32, atol=5e-2, rtol=5e-2), \
            "mismatch vs f32 reference"

    # sanity: downstream losses of LatentPredictionBatch
    _ = jax.block_until_ready(bce_with_logits(logits, 0.95))
    _ = jax.block_until_ready(bce_with_logits(logits, 0.05))

    print("KERNEL_OK")
</pallas_src>

<mosaic_0001>
module attributes {stable_mosaic.version = 11 : i64} {
  func.func @latent_disc_kernel(%arg0: i32, %arg1: memref<128x16xf32, #tpu.memory_space<vmem>>, %arg2: memref<96x32xbf16, #tpu.memory_space<vmem>>, %arg3: memref<32x32xf32, #tpu.memory_space<vmem>>, %arg4: memref<1x1x128xf32, #tpu.memory_space<vmem>>) attributes {dimension_semantics = [#tpu.dimension_semantics<parallel>], iteration_bounds = array<i64: 3>, scalar_prefetch = 0 : i64, scratch_operands = 0 : i64, tpu.core_type = #tpu.core_type<tc>, window_params = [{transform_indices = @transform_0, window_bounds = array<i64: 128, 16>}, {pipeline_mode = #tpu.pipeline_mode<synchronous>, transform_indices = @transform_1, window_bounds = array<i64: 96, 32>}, {pipeline_mode = #tpu.pipeline_mode<synchronous>, transform_indices = @transform_2, window_bounds = array<i64: 32, 32>}, {transform_indices = @transform_3, window_bounds = array<i64: 1, 1, 128>}]} {
    %c0 = arith.constant 0 : index
    %c0_0 = arith.constant 0 : index
    %0 = vector.load %arg1[%c0, %c0_0] : memref<128x16xf32, #tpu.memory_space<vmem>>, vector<128x16xf32>
    %1 = arith.truncf %0 : vector<128x16xf32> to vector<128x16xbf16>
    %c0_1 = arith.constant 0 : index
    %c0_2 = arith.constant 0 : index
    %2 = vector.load %arg2[%c0_1, %c0_2] : memref<96x32xbf16, #tpu.memory_space<vmem>>, vector<16x32xbf16>
    %c16 = arith.constant 16 : index
    %c0_3 = arith.constant 0 : index
    %3 = vector.load %arg2[%c16, %c0_3] : memref<96x32xbf16, #tpu.memory_space<vmem>>, vector<32x32xbf16>
    %c48 = arith.constant 48 : index
    %c0_4 = arith.constant 0 : index
    %4 = vector.load %arg2[%c48, %c0_4] : memref<96x32xbf16, #tpu.memory_space<vmem>>, vector<32x32xbf16>
    %c80 = arith.constant 80 : index
    %c0_5 = arith.constant 0 : index
    %5 = vector.load %arg2[%c80, %c0_5] : memref<96x32xbf16, #tpu.memory_space<vmem>>, vector<16x32xbf16>
    %c0_6 = arith.constant 0 : index
    %c0_7 = arith.constant 0 : index
    %6 = vector.load %arg3[%c0_6, %c0_7] : memref<32x32xf32, #tpu.memory_space<vmem>>, vector<1x32xf32>
    %c8 = arith.constant 8 : index
    %c0_8 = arith.constant 0 : index
    %7 = vector.load %arg3[%c8, %c0_8] : memref<32x32xf32, #tpu.memory_space<vmem>>, vector<1x32xf32>
    %c16_9 = arith.constant 16 : index
    %c0_10 = arith.constant 0 : index
    %8 = vector.load %arg3[%c16_9, %c0_10] : memref<32x32xf32, #tpu.memory_space<vmem>>, vector<1x32xf32>
    %c24 = arith.constant 24 : index
    %c0_11 = arith.constant 0 : index
    %9 = vector.load %arg3[%c24, %c0_11] : memref<32x32xf32, #tpu.memory_space<vmem>>, vector<1x1xf32>
    %cst = arith.constant dense<0.000000e+00> : vector<128x32xf32>
    %10 = tpu.matmul %1, %2, %cst {dimension_numbers = #tpu.dot_dimension_numbers<[1], [0], [0], [1], [0, 0, 1, 1], [], []>} : vector<128x16xbf16>, vector<16x32xbf16>, vector<128x32xf32> -> vector<128x32xf32>
    %11 = vector.broadcast %6 : vector<1x32xf32> to vector<128x32xf32>
    %12 = arith.addf %10, %11 : vector<128x32xf32>
    %cst_12 = arith.constant 0.000000e+00 : f32
    %13 = vector.broadcast %cst_12 : f32 to vector<128x32xf32>
    %14 = arith.cmpf ogt, %12, %13 : vector<128x32xf32>
    %cst_13 = arith.constant 2.000000e-02 : f32
    %15 = vector.broadcast %cst_13 : f32 to vector<128x32xf32>
    %16 = arith.mulf %15, %12 : vector<128x32xf32>
    %17 = arith.select %14, %12, %16 : vector<128x32xi1>, vector<128x32xf32>
    %18 = arith.truncf %17 : vector<128x32xf32> to vector<128x32xbf16>
    %cst_14 = arith.constant dense<0.000000e+00> : vector<128x32xf32>
    %19 = tpu.matmul %18, %3, %cst_14 {dimension_numbers = #tpu.dot_dimension_numbers<[1], [0], [0], [1], [0, 0, 1, 1], [], []>} : vector<128x32xbf16>, vector<32x32xbf16>, vector<128x32xf32> -> vector<128x32xf32>
    %20 = vector.broadcast %7 : vector<1x32xf32> to vector<128x32xf32>
    %21 = arith.addf %19, %20 : vector<128x32xf32>
    %cst_15 = arith.constant 0.000000e+00 : f32
    %22 = vector.broadcast %cst_15 : f32 to vector<128x32xf32>
    %23 = arith.cmpf ogt, %21, %22 : vector<128x32xf32>
    %cst_16 = arith.constant 2.000000e-02 : f32
    %24 = vector.broadcast %cst_16 : f32 to vector<128x32xf32>
    %25 = arith.mulf %24, %21 : vector<128x32xf32>
    %26 = arith.select %23, %21, %25 : vector<128x32xi1>, vector<128x32xf32>
    %27 = arith.truncf %26 : vector<128x32xf32> to vector<128x32xbf16>
    %cst_17 = arith.constant dense<0.000000e+00> : vector<128x32xf32>
    %28 = tpu.matmul %27, %4, %cst_17 {dimension_numbers = #tpu.dot_dimension_numbers<[1], [0], [0], [1], [0, 0, 1, 1], [], []>} : vector<128x32xbf16>, vector<32x32xbf16>, vector<128x32xf32> -> vector<128x32xf32>
    %29 = vector.broadcast %8 : vector<1x32xf32> to vector<128x32xf32>
    %30 = arith.addf %28, %29 : vector<128x32xf32>
    %cst_18 = arith.constant 0.000000e+00 : f32
    %31 = vector.broadcast %cst_18 : f32 to vector<128x32xf32>
    %32 = arith.cmpf ogt, %30, %31 : vector<128x32xf32>
    %cst_19 = arith.constant 2.000000e-02 : f32
    %33 = vector.broadcast %cst_19 : f32 to vector<128x32xf32>
    %34 = arith.mulf %33, %30 : vector<128x32xf32>
    %35 = arith.select %32, %30, %34 : vector<128x32xi1>, vector<128x32xf32>
    %36 = arith.truncf %35 : vector<128x32xf32> to vector<128x32xbf16>
    %cst_20 = arith.constant dense<0.000000e+00> : vector<16x128xf32>
    %37 = tpu.matmul %5, %36, %cst_20 {dimension_numbers = #tpu.dot_dimension_numbers<[1], [1], [0], [0], [0, 0, 1, 0], [], []>} : vector<16x32xbf16>, vector<128x32xbf16>, vector<16x128xf32> -> vector<16x128xf32>
    %38 = vector.extract_strided_slice %37 {offsets = [0, 0], sizes = [1, 128], strides = [1, 1]} : vector<16x128xf32> to vector<1x128xf32>
    %39 = vector.broadcast %9 : vector<1x1xf32> to vector<1x128xf32>
    %40 = arith.addf %38, %39 : vector<1x128xf32>
    %41 = vector.shape_cast %40 : vector<1x128xf32> to vector<1x1x128xf32>
    %c0_21 = arith.constant 0 : index
    %c0_22 = arith.constant 0 : index
    %c0_23 = arith.constant 0 : index
    %42 = vector.load %arg4[%c0_21, %c0_22, %c0_23] : memref<1x1x128xf32, #tpu.memory_space<vmem>>, vector<1x1x128xf32>
    tpu.vector_store %arg4[%c0_21, %c0_22, %c0_23], %41 {strides = array<i32>} : memref<1x1x128xf32, #tpu.memory_space<vmem>>, vector<1x1x128xf32>,
    return
  }
  func.func @transform_0(%arg0: i32) -> (i32, i32) {
    %c0_i32 = arith.constant 0 : i32
    %c0_i32_0 = arith.constant 0 : i32
    return %arg0, %c0_i32 : i32, i32
  }
  func.func @transform_1(%arg0: i32) -> (i32, i32) {
    %c0_i32 = arith.constant 0 : i32
    %c0_i32_0 = arith.constant 0 : i32
    %c0_i32_1 = arith.constant 0 : i32
    return %c0_i32, %c0_i32_0 : i32, i32
  }
  func.func @transform_2(%arg0: i32) -> (i32, i32) {
    %c0_i32 = arith.constant 0 : i32
    %c0_i32_0 = arith.constant 0 : i32
    %c0_i32_1 = arith.constant 0 : i32
    return %c0_i32, %c0_i32_0 : i32, i32
  }
  func.func @transform_3(%arg0: i32) -> (i32, i32, i32) {
    %c0_i32 = arith.constant 0 : i32
    %c0_i32_0 = arith.constant 0 : i32
    %c0_i32_1 = arith.constant 0 : i32
    return %arg0, %c0_i32, %c0_i32_0 : i32, i32, i32
  }
}

</mosaic_0001>

<llo_original>
// kernel: tpu_custom_call.1
$region0: #{tpu_custom_call.1}
  #allocation0 [shape = 'u32[]', space=smem, size = 0x4, offset = 0x4, fixed_abs, tag = 'smem constant byte address 0x4 - core index']
  #allocation1 [shape = 'u32[144,128]{1,0:T(1,128)}', space=vmem, size = 0x12000, scoped, tag = 'internal scratch']
  %s0 = inlined_call_operand.vmem [shape: f32[384,16], index: 0, kind: input, shape index: {}]
  %s1 = inlined_call_operand.vmem [shape: bf16[96,32], index: 1, kind: input, shape index: {}]
  %s2 = inlined_call_operand.vmem [shape: f32[32,32], index: 2, kind: input, shape index: {}]
  %s3 = inlined_call_operand.hbm [shape: f32[3,1,128], index: 3, kind: output, shape index: {}]
  %s4 = sld [smem:[#allocation0]]
  $region45: #{tpu_custom_call.1} parent=0
    _
  %s6 = ssub.s32 1, %s4
  %s7 = scalar_select 0, %s6, %s4
  $region1: #{tpu_custom_call.1} parent=0
    #allocation2 [shape = 'u8[1024]{0}', space=vmem, size = 0x400, scoped, tag = 'output window, operand 0']
    #allocation3 [shape = 's32[2]{0}', space=sflag, size = 0x8, scoped, tag = 'scoped memory for tpu_custom_call.1']
    %8 = vsyncpa [#allocation3], 0
    %s9 = scalar_lea.sflag [#allocation3], 1
    %10 = vsyncpa %s9, 0
    loop: start=0, step=1, limit=5
    $region2: #{tpu_custom_call.1} parent=1 // loop_pre_header
      _
    $region3: #{tpu_custom_call.1} parent=1 // loop_header
      %s12 = sphi 0, %s16
      %p13 = scmp.ge.s32.totalorder %s12, 5
      %s22 = sphi 0, %s24
      %s25 = sphi 0, %s22
      %s26 = sphi 0, %s25
      %s42 = sphi 0, %s26
      %s46 = sphi 0, %s46
      %s48 = sphi 0, %s46
      %s49 = sphi 0, %s48
      %s63 = sphi 0, %s49
      %s67 = sphi 0, %s67
      %s69 = sphi 0, %s67
      %s70 = sphi 0, %s69
      %s84 = sphi 0, %s70
      %s90 = sphi 0, %s92
      %s93 = sphi 0, %s90
      %s94 = sphi 0, %s93
      %s110 = sphi 0, %s94
    $region4: #{tpu_custom_call.1} parent=1 // loop_header_branch
      %15 = sbr.rel (%p13) target = $region8
    $region5: #{tpu_custom_call.1} parent=1 // loop_body
      %s17 = ssub.s32 %s12, 1
      %s18 = ssub.s32 %s12, 2
      %s19 = sadd.s32 %s12, 1
      %s20 = ssub.s32 %s12, %s19
      %p21 = scmp.eq.s32.totalorder %s20, 0
      %s23 = sadd.s32 %s22, 1
      %s24 = scalar_select %p21, %s22, %s23
      %p27 = pneg %p21
      %p28 = scmp.eq.s32.totalorder %s12, 2
      %p29 = por %p27, %p28
      %p30 = scmp.ne.s32.totalorder %s22, %s25
      %p31 = scmp.eq.s32.totalorder %s12, 0
      %p32 = por %p30, %p31
      %p33 = scmp.ne.s32.totalorder %s22, %s25
      %p34 = scmp.eq.s32.totalorder %s17, 2
      %p35 = por %p33, %p34
      %p36 = scmp.ne.s32.totalorder %s25, %s26
      %p37 = scmp.eq.s32.totalorder %s17, 0
      %p38 = por %p36, %p37
      %p39 = scmp.ne.s32.totalorder %s25, %s26
      %p40 = scmp.eq.s32.totalorder %s18, 2
      %p41 = por %p39, %p40
      %p43 = scmp.ne.s32.totalorder %s26, %s42
      %p44 = scmp.eq.s32.totalorder %s18, 0
      %p45 = por %p43, %p44
      %s47 = sadd.s32 %s46, 1
      %p50 = scmp.eq.s32.totalorder %s12, 2
      %p51 = scmp.ne.s32.totalorder %s46, %s48
      %p52 = scmp.eq.s32.totalorder %s12, 0
      %p53 = por %p51, %p52
      %p54 = scmp.ne.s32.totalorder %s46, %s48
      %p55 = scmp.eq.s32.totalorder %s17, 2
      %p56 = por %p54, %p55
      %p57 = scmp.ne.s32.totalorder %s48, %s49
      %p58 = scmp.eq.s32.totalorder %s17, 0
      %p59 = por %p57, %p58
      %p60 = scmp.ne.s32.totalorder %s48, %s49
      %p61 = scmp.eq.s32.totalorder %s18, 2
      %p62 = por %p60, %p61
      %p64 = scmp.ne.s32.totalorder %s49, %s63
      %p65 = scmp.eq.s32.totalorder %s18, 0
      %p66 = por %p64, %p65
      %s68 = sadd.s32 %s67, 1
      %p71 = scmp.eq.s32.totalorder %s12, 2
      %p72 = scmp.ne.s32.totalorder %s67, %s69
      %p73 = scmp.eq.s32.totalorder %s12, 0
      %p74 = por %p72, %p73
      %p75 = scmp.ne.s32.totalorder %s67, %s69
      %p76 = scmp.eq.s32.totalorder %s17, 2
      %p77 = por %p75, %p76
      %p78 = scmp.ne.s32.totalorder %s69, %s70
      %p79 = scmp.eq.s32.totalorder %s17, 0
      %p80 = por %p78, %p79
      %p81 = scmp.ne.s32.totalorder %s69, %s70
      %p82 = scmp.eq.s32.totalorder %s18, 2
      %p83 = por %p81, %p82
      %p85 = scmp.ne.s32.totalorder %s70, %s84
      %p86 = scmp.eq.s32.totalorder %s18, 0
      %p87 = por %p85, %p86
      %s88 = ssub.s32 %s12, %s19
      %p89 = scmp.eq.s32.totalorder %s88, 0
      %s91 = sadd.s32 %s90, 1
      %s92 = scalar_select %p89, %s90, %s91
      %p95 = pneg %p89
      %p96 = scmp.eq.s32.totalorder %s12, 2
      %p97 = por %p95, %p96
      %p98 = scmp.ne.s32.totalorder %s90, %s93
      %p99 = scmp.eq.s32.totalorder %s12, 0
      %p100 = por %p98, %p99
      %p101 = scmp.ne.s32.totalorder %s90, %s93
      %p102 = scmp.eq.s32.totalorder %s17, 2
      %p103 = por %p101, %p102
      %p104 = scmp.ne.s32.totalorder %s93, %s94
      %p105 = scmp.eq.s32.totalorder %s17, 0
      %p106 = por %p104, %p105
      %p107 = scmp.ne.s32.totalorder %s93, %s94
      %p108 = scmp.eq.s32.totalorder %s18, 2
      %p109 = por %p107, %p108
      %p111 = scmp.ne.s32.totalorder %s94, %s110
      %p112 = scmp.eq.s32.totalorder %s18, 0
      %p113 = por %p111, %p112
      %p114 = scmp.le.s32.totalorder 1, %s12
      %p115 = scmp.lt.s32.totalorder %s12, 4
      %p116 = pnand %p114, %p115
      %p117 = pneg %p116
      // Predicated region
      $region9: #{tpu_custom_call.1} parent=5 // pred_check
        _
      $region10: #{tpu_custom_call.1} parent=5 // pred_check_branch
        %119 = sbr.rel (%p116) target = $region12
      $region11: #{tpu_custom_call.1} parent=5 // pred_region
        %s120 = ssub.s32 %s12, 1
        // Predicated region
        $region13: #{tpu_custom_call.1} parent=11 // pred_check
          %p121 = pneg %p59
        $region14: #{tpu_custom_call.1} parent=11 // pred_check_branch
          %123 = sbr.rel (%p121) target = $region16
        $region15: #{tpu_custom_call.1} parent=11 // pred_region
          _
        $region16: #{tpu_custom_call.1} parent=11 // pred_fallthru
          _
        // Predicated region
        $region17: #{tpu_custom_call.1} parent=11 // pred_check
          %p124 = pneg %p80
        $region18: #{tpu_custom_call.1} parent=11 // pred_check_branch
          %126 = sbr.rel (%p124) target = $region20
        $region19: #{tpu_custom_call.1} parent=11 // pred_region
          _
        $region20: #{tpu_custom_call.1} parent=11 // pred_fallthru
          _
      $region12: #{tpu_custom_call.1} parent=5 // pred_fallthru
        _
      %p127 = scmp.lt.s32.totalorder %s12, 3
      // Predicated region
      $region21: #{tpu_custom_call.1} parent=5 // pred_check
        %p128 = pneg %p127
      $region22: #{tpu_custom_call.1} parent=5 // pred_check_branch
        %130 = sbr.rel (%p128) target = $region24
      $region23: #{tpu_custom_call.1} parent=5 // pred_region
        // Predicated region
        $region25: #{tpu_custom_call.1} parent=23 // pred_check
          %p131 = pneg %p32
        $region26: #{tpu_custom_call.1} parent=23 // pred_check_branch
          %133 = sbr.rel (%p131) target = $region28
        $region27: #{tpu_custom_call.1} parent=23 // pred_region
          %s134 = smul.u32 16, %s12
          %p135 = scmp.lt.s32.totalorder %s134, 47
          %s136 = scalar_select %p135, %s134, 47
          %s137 = smul.addr %s136, 8
          %s138 = scalar_lea.vmem %s0, %s137
          %s139 = smul.u32 16, %s12
        $region28: #{tpu_custom_call.1} parent=23 // pred_fallthru
          _
      $region24: #{tpu_custom_call.1} parent=5 // pred_fallthru
        _
      %p140 = scmp.le.s32.totalorder 1, %s12
      %p141 = scmp.lt.s32.totalorder %s12, 4
      %p142 = pnand %p140, %p141
      %p143 = pneg %p142
      // Predicated region
      $region29: #{tpu_custom_call.1} parent=5 // pred_check
        _
      $region30: #{tpu_custom_call.1} parent=5 // pred_check_branch
        %145 = sbr.rel (%p142) target = $region32
      $region31: #{tpu_custom_call.1} parent=5 // pred_region
        %s146 = ssub.s32 %s12, 1
        %s147 = smul.u32 16, %s17
        %p148 = scmp.lt.s32.totalorder %s147, 47
        %s149 = scalar_select %p148, %s147, 47
        %s150 = smul.addr %s149, 8
        %s151 = scalar_lea.vmem %s0, %s150
        %p152 = pneg %p38
        %p153 = pneg %p35
        %p154 = pneg %p59
        %p155 = pneg %p56
        %p156 = pneg %p80
        %p157 = pneg %p77
        %p158 = pneg %p106
        %p159 = pneg %p103
        %s160 = sand.u32 %s93, 1
        %s161 = scalar_lea.sflag [#allocation3], %s160
        %s162 = sand.u32 %s93, 1
        %s163 = scalar_lea.vmem [#allocation2], %s162
        %s164 = smul.u32 16, %s17
        %p165 = scmp.lt.s32.totalorder %s164, 47
        %s166 = scalar_select %p165, %s164, 47
        %s167 = smul.addr %s166, 8
        %s168 = scalar_lea.vmem %s0, %s167
        %s169 = smul.u32 16, %s17
        %v171 = vld [vmem:[%s168] sm:$0xff]
        %v172 = vld [vmem:[%s168 + $0x8] sm:$0xff]
        %v173 = vld [vmem:[%s168 + $0x10] sm:$0xff]
        %v174 = vld [vmem:[%s168 + $0x18] sm:$0xff]
        %v175 = vld [vmem:[%s168 + $0x20] sm:$0xff]
        %v176 = vld [vmem:[%s168 + $0x28] sm:$0xff]
        %v177 = vld [vmem:[%s168 + $0x30] sm:$0xff]
        %v178 = vld [vmem:[%s168 + $0x38] sm:$0xff]
        %v179 = vld [vmem:[%s168 + $0x40] sm:$0xff]
        %v180 = vld [vmem:[%s168 + $0x48] sm:$0xff]
        %v181 = vld [vmem:[%s168 + $0x50] sm:$0xff]
        %v182 = vld [vmem:[%s168 + $0x58] sm:$0xff]
        %v183 = vld [vmem:[%s168 + $0x60] sm:$0xff]
        %v184 = vld [vmem:[%s168 + $0x68] sm:$0xff]
        %v185 = vld [vmem:[%s168 + $0x70] sm:$0xff]
        %v186 = vld [vmem:[%s168 + $0x78] sm:$0xff]
        %v187 = vpack.c.bf16 %v172, %v171
        %v188 = vpack.c.bf16 %v174, %v173
        %v189 = vpack.c.bf16 %v176, %v175
        %v190 = vpack.c.bf16 %v178, %v177
        %v191 = vpack.c.bf16 %v180, %v179
        %v192 = vpack.c.bf16 %v182, %v181
        %v193 = vpack.c.bf16 %v184, %v183
        %v194 = vpack.c.bf16 %v186, %v185
        %v195 = vld [vmem:[%s1] sm:$0xf]
        %v196 = vld [vmem:[%s1 + $0x4] sm:$0xf]
        %v197 = vld [vmem:[%s1 + $0x8] sm:$0xf]
        %v198 = vld [vmem:[%s1 + $0xc] sm:$0xf]
        %v199 = vld [vmem:[%s1 + $0x10] sm:$0xf]
        %v200 = vld [vmem:[%s1 + $0x14] sm:$0xf]
        %v201 = vld [vmem:[%s1 + $0x18] sm:$0xf]
        %v202 = vld [vmem:[%s1 + $0x1c] sm:$0xf]
        %v203 = vld [vmem:[%s1 + $0x20] sm:$0xf]
        %v204 = vld [vmem:[%s1 + $0x24] sm:$0xf]
        %v205 = vld [vmem:[%s1 + $0x28] sm:$0xf]
        %v206 = vld [vmem:[%s1 + $0x2c] sm:$0xf]
        %v207 = vld [vmem:[%s2] sm:$0x1]
        %v208 = vld [vmem:[%s2 + $0x8] sm:$0x1]
        %v209 = vld [vmem:[%s2 + $0x10] sm:$0x1]
        %v210 = vld [vmem:[%s2 + $0x18] sm:$0x1]
        %v211 = vlaneseq
        %v212 = vshrl.u32 %v211, 7
        %v213 = vsub.s32 0, %v212
        %v214 = vrot.slane %v207, %v213
        %v217 = vunpack.c.l.b16 %v195
        %v218 = vunpack.c.l.b16 %v196
        %v219 = vpack.c.b16 %v218, %v217
        %vm221 = vcmask 130048
        %v223 = vsel %vm221, %v187, 0
        %v226 = vsel %vm221, %v188, 0
        %v229 = vsel %vm221, %v189, 0
        %v232 = vsel %vm221, %v190, 0
        %v235 = vsel %vm221, %v191, 0
        %v238 = vsel %vm221, %v192, 0
        %v241 = vsel %vm221, %v193, 0
        %v244 = vsel %vm221, %v194, 0
        %246 = vmatprep.subr.bf16.mxu0 0
        %247 = vmatpush1.bf16.msra.mxu0 0
        %248 = vmatprep.subr.bf16.mxu0 0
        %249 = vmatpush1.bf16.msra.mxu0 0
        %250 = vmatprep.subr.bf16.mxu0 0
        %251 = vmatpush1.bf16.msra.mxu0 0
        %252 = vmatprep.subr.bf16.mxu0 0
        %253 = vmatpush1.bf16.msra.mxu0 0
        %254 = vmatprep.subr.bf16.mxu0 0
        %255 = vmatpush1.bf16.msra.mxu0 0
        %256 = vmatprep.subr.bf16.mxu0 0
        %257 = vmatpush1.bf16.msra.mxu0 0
        %258 = vmatprep.subr.bf16.mxu0 0
        %259 = vmatpush1.bf16.msra.mxu0 0
        %260 = vmatprep.subr.bf16.mxu0 0
        %261 = vmatpush1.bf16.msra.mxu0 %v219
        %262 = vmatprep.subr.bf16.mxu0 0
        %263 = vmatpush2.bf16.msra.mxu0 0
        %264 = vmatprep.subr.bf16.mxu0 0
        %265 = vmatpush2.bf16.msra.mxu0 0
        %266 = vmatprep.subr.bf16.mxu0 0
        %267 = vmatpush2.bf16.msra.mxu0 0
        %268 = vmatprep.subr.bf16.mxu0 0
        %269 = vmatpush2.bf16.msra.mxu0 0
        %270 = vmatprep.subr.bf16.mxu0 0
        %271 = vmatpush2.bf16.msra.mxu0 0
        %272 = vmatprep.subr.bf16.mxu0 0
        %273 = vmatpush2.bf16.msra.mxu0 0
        %274 = vmatprep.subr.bf16.mxu0 0
        %275 = vmatpush2.bf16.msra.mxu0 0
        %276 = vmatprep.subr.bf16.mxu0 0
        %277 = vmatpush2.bf16.msra.mxu0 0
        %278 = vmatprep.mubr.bf16.mxu0 0
        %279 = vmatmul.mubr.bf16.gmra.mxu0 %v223
        %v280 = vpop.f32.mrf.mxu0
        %v281 = vadd.f32 %v214, %v280
        %v282 = vpop.f32.mrf.mxu0
        %v283 = vpop.f32.mrf.mxu0
        %v284 = vadd.f32 %v214, %v283
        %v285 = vpop.f32.mrf.mxu0
        %286 = vmatprep.mubr.bf16.mxu0 0
        %287 = vmatmul.mubr.bf16.gmra.mxu0 %v226
        %v288 = vpop.f32.mrf.mxu0
        %v289 = vadd.f32 %v214, %v288
        %v290 = vpop.f32.mrf.mxu0
        %v291 = vpop.f32.mrf.mxu0
        %v292 = vadd.f32 %v214, %v291
        %v293 = vpop.f32.mrf.mxu0
        %294 = vmatprep.mubr.bf16.mxu0 0
        %295 = vmatmul.mubr.bf16.gmra.mxu0 %v229
        %v296 = vpop.f32.mrf.mxu0
        %v297 = vadd.f32 %v214, %v296
        %v298 = vpop.f32.mrf.mxu0
        %v299 = vpop.f32.mrf.mxu0
        %v300 = vadd.f32 %v214, %v299
        %v301 = vpop.f32.mrf.mxu0
        %302 = vmatprep.mubr.bf16.mxu0 0
        %303 = vmatmul.mubr.bf16.gmra.mxu0 %v232
        %v304 = vpop.f32.mrf.mxu0
        %v305 = vadd.f32 %v214, %v304
        %v306 = vpop.f32.mrf.mxu0
        %v307 = vpop.f32.mrf.mxu0
        %v308 = vadd.f32 %v214, %v307
        %v309 = vpop.f32.mrf.mxu0
        %310 = vmatprep.mubr.bf16.mxu0 0
        %311 = vmatmul.mubr.bf16.gmra.mxu0 %v235
        %v312 = vpop.f32.mrf.mxu0
        %v313 = vadd.f32 %v214, %v312
        %v314 = vpop.f32.mrf.mxu0
        %v315 = vpop.f32.mrf.mxu0
        %v316 = vadd.f32 %v214, %v315
        %v317 = vpop.f32.mrf.mxu0
        %318 = vmatprep.mubr.bf16.mxu0 0
        %319 = vmatmul.mubr.bf16.gmra.mxu0 %v238
        %v320 = vpop.f32.mrf.mxu0
        %v321 = vadd.f32 %v214, %v320
        %v322 = vpop.f32.mrf.mxu0
        %v323 = vpop.f32.mrf.mxu0
        %v324 = vadd.f32 %v214, %v323
        %v325 = vpop.f32.mrf.mxu0
        %326 = vmatprep.mubr.bf16.mxu0 0
        %327 = vmatmul.mubr.bf16.gmra.mxu0 %v241
        %v328 = vpop.f32.mrf.mxu0
        %v329 = vadd.f32 %v214, %v328
        %v330 = vpop.f32.mrf.mxu0
        %v331 = vpop.f32.mrf.mxu0
        %v332 = vadd.f32 %v214, %v331
        %v333 = vpop.f32.mrf.mxu0
        %334 = vmatprep.mubr.bf16.mxu0 0
        %335 = vmatmul.mubr.bf16.gmra.mxu0 %v244
        %v336 = vpop.f32.mrf.mxu0
        %v337 = vadd.f32 %v214, %v336
        %v338 = vpop.f32.mrf.mxu0
        %v339 = vpop.f32.mrf.mxu0
        %v340 = vadd.f32 %v214, %v339
        %v341 = vpop.f32.mrf.mxu0
        %342 = vdwg.mxu0
        %vm343 = vcmp.gt.f32.partialorder %v281, 0.0
        %vm344 = vcmp.gt.f32.partialorder %v284, 0.0
        %vm345 = vcmp.gt.f32.partialorder %v289, 0.0
        %vm346 = vcmp.gt.f32.partialorder %v292, 0.0
        %vm347 = vcmp.gt.f32.partialorder %v297, 0.0
        %vm348 = vcmp.gt.f32.partialorder %v300, 0.0
        %vm349 = vcmp.gt.f32.partialorder %v305, 0.0
        %vm350 = vcmp.gt.f32.partialorder %v308, 0.0
        %vm351 = vcmp.gt.f32.partialorder %v313, 0.0
        %vm352 = vcmp.gt.f32.partialorder %v316, 0.0
        %vm353 = vcmp.gt.f32.partialorder %v321, 0.0
        %vm354 = vcmp.gt.f32.partialorder %v324, 0.0
        %vm355 = vcmp.gt.f32.partialorder %v329, 0.0
        %vm356 = vcmp.gt.f32.partialorder %v332, 0.0
        %vm357 = vcmp.gt.f32.partialorder %v337, 0.0
        %vm358 = vcmp.gt.f32.partialorder %v340, 0.0
        %v359 = vmul.f32 %v281, 0.02
        %v360 = vmul.f32 %v284, 0.02
        %v361 = vmul.f32 %v289, 0.02
        %v362 = vmul.f32 %v292, 0.02
        %v363 = vmul.f32 %v297, 0.02
        %v364 = vmul.f32 %v300, 0.02
        %v365 = vmul.f32 %v305, 0.02
        %v366 = vmul.f32 %v308, 0.02
        %v367 = vmul.f32 %v313, 0.02
        %v368 = vmul.f32 %v316, 0.02
        %v369 = vmul.f32 %v321, 0.02
        %v370 = vmul.f32 %v324, 0.02
        %v371 = vmul.f32 %v329, 0.02
        %v372 = vmul.f32 %v332, 0.02
        %v373 = vmul.f32 %v337, 0.02
        %v374 = vmul.f32 %v340, 0.02
        %v375 = vsel %vm343, %v281, %v359
        %v376 = vsel %vm344, %v284, %v360
        %v377 = vsel %vm345, %v289, %v361
        %v378 = vsel %vm346, %v292, %v362
        %v379 = vsel %vm347, %v297, %v363
        %v380 = vsel %vm348, %v300, %v364
        %v381 = vsel %vm349, %v305, %v365
        %v382 = vsel %vm350, %v308, %v366
        %v383 = vsel %vm351, %v313, %v367
        %v384 = vsel %vm352, %v316, %v368
        %v385 = vsel %vm353, %v321, %v369
        %v386 = vsel %vm354, %v324, %v370
        %v387 = vsel %vm355, %v329, %v371
        %v388 = vsel %vm356, %v332, %v372
        %v389 = vsel %vm357, %v337, %v373
        %v390 = vsel %vm358, %v340, %v374
        %v391 = vpack.c.bf16 %v376, %v375
        %v392 = vpack.c.bf16 %v378, %v377
        %v393 = vpack.c.bf16 %v380, %v379
        %v394 = vpack.c.bf16 %v382, %v381
        %v395 = vpack.c.bf16 %v384, %v383
        %v396 = vpack.c.bf16 %v386, %v385
        %v397 = vpack.c.bf16 %v388, %v387
        %v398 = vpack.c.bf16 %v390, %v389
        %v399 = vlaneseq
        %v400 = vshrl.u32 %v399, 7
        %v401 = vsub.s32 0, %v400
        %v402 = vrot.slane %v208, %v401
        %v407 = vunpack.c.l.b16 %v197
        %v408 = vunpack.c.l.b16 %v198
        %v409 = vunpack.c.l.b16 %v199
        %v410 = vunpack.c.l.b16 %v200
        %v411 = vpack.c.b16 %v408, %v407
        %v412 = vpack.c.b16 %v410, %v409
        %vm415 = vcmask 261120
        %v417 = vsel %vm415, %v391, 0
        %v420 = vsel %vm415, %v392, 0
        %v423 = vsel %vm415, %v393, 0
        %v426 = vsel %vm415, %v394, 0
        %v429 = vsel %vm415, %v395, 0
        %v432 = vsel %vm415, %v396, 0
        %v435 = vsel %vm415, %v397, 0
        %v438 = vsel %vm415, %v398, 0
        %440 = vmatprep.subr.bf16.mxu0 0
        %441 = vmatpush1.bf16.msra.mxu0 0
        %442 = vmatprep.subr.bf16.mxu0 0
        %443 = vmatpush1.bf16.msra.mxu0 0
        %444 = vmatprep.subr.bf16.mxu0 0
        %445 = vmatpush1.bf16.msra.mxu0 0
        %446 = vmatprep.subr.bf16.mxu0 0
        %447 = vmatpush1.bf16.msra.mxu0 0
        %448 = vmatprep.subr.bf16.mxu0 0
        %449 = vmatpush1.bf16.msra.mxu0 0
        %450 = vmatprep.subr.bf16.mxu0 0
        %451 = vmatpush1.bf16.msra.mxu0 0
        %452 = vmatprep.subr.bf16.mxu0 0
        %453 = vmatpush1.bf16.msra.mxu0 %v412
        %454 = vmatprep.subr.bf16.mxu0 0
        %455 = vmatpush1.bf16.msra.mxu0 %v411
        %456 = vmatprep.subr.bf16.mxu0 0
        %457 = vmatpush2.bf16.msra.mxu0 0
        %458 = vmatprep.subr.bf16.mxu0 0
        %459 = vmatpush2.bf16.msra.mxu0 0
        %460 = vmatprep.subr.bf16.mxu0 0
        %461 = vmatpush2.bf16.msra.mxu0 0
        %462 = vmatprep.subr.bf16.mxu0 0
        %463 = vmatpush2.bf16.msra.mxu0 0
        %464 = vmatprep.subr.bf16.mxu0 0
        %465 = vmatpush2.bf16.msra.mxu0 0
        %466 = vmatprep.subr.bf16.mxu0 0
        %467 = vmatpush2.bf16.msra.mxu0 0
        %468 = vmatprep.subr.bf16.mxu0 0
        %469 = vmatpush2.bf16.msra.mxu0 0
        %470 = vmatprep.subr.bf16.mxu0 0
        %471 = vmatpush2.bf16.msra.mxu0 0
        %472 = vmatprep.mubr.bf16.mxu0 0
        %473 = vmatmul.mubr.bf16.gmra.mxu0 %v417
        %v474 = vpop.f32.mrf.mxu0
        %v475 = vadd.f32 %v402, %v474
        %v476 = vpop.f32.mrf.mxu0
        %v477 = vpop.f32.mrf.mxu0
        %v478 = vadd.f32 %v402, %v477
        %v479 = vpop.f32.mrf.mxu0
        %480 = vmatprep.mubr.bf16.mxu0 0
        %481 = vmatmul.mubr.bf16.gmra.mxu0 %v420
        %v482 = vpop.f32.mrf.mxu0
        %v483 = vadd.f32 %v402, %v482
        %v484 = vpop.f32.mrf.mxu0
        %v485 = vpop.f32.mrf.mxu0
        %v486 = vadd.f32 %v402, %v485
        %v487 = vpop.f32.mrf.mxu0
        %488 = vmatprep.mubr.bf16.mxu0 0
        %489 = vmatmul.mubr.bf16.gmra.mxu0 %v423
        %v490 = vpop.f32.mrf.mxu0
        %v491 = vadd.f32 %v402, %v490
        %v492 = vpop.f32.mrf.mxu0
        %v493 = vpop.f32.mrf.mxu0
        %v494 = vadd.f32 %v402, %v493
        %v495 = vpop.f32.mrf.mxu0
        %496 = vmatprep.mubr.bf16.mxu0 0
        %497 = vmatmul.mubr.bf16.gmra.mxu0 %v426
        %v498 = vpop.f32.mrf.mxu0
        %v499 = vadd.f32 %v402, %v498
        %v500 = vpop.f32.mrf.mxu0
        %v501 = vpop.f32.mrf.mxu0
        %v502 = vadd.f32 %v402, %v501
        %v503 = vpop.f32.mrf.mxu0
        %504 = vmatprep.mubr.bf16.mxu0 0
        %505 = vmatmul.mubr.bf16.gmra.mxu0 %v429
        %v506 = vpop.f32.mrf.mxu0
        %v507 = vadd.f32 %v402, %v506
        %v508 = vpop.f32.mrf.mxu0
        %v509 = vpop.f32.mrf.mxu0
        %v510 = vadd.f32 %v402, %v509
        %v511 = vpop.f32.mrf.mxu0
        %512 = vmatprep.mubr.bf16.mxu0 0
        %513 = vmatmul.mubr.bf16.gmra.mxu0 %v432
        %v514 = vpop.f32.mrf.mxu0
        %v515 = vadd.f32 %v402, %v514
        %v516 = vpop.f32.mrf.mxu0
        %v517 = vpop.f32.mrf.mxu0
        %v518 = vadd.f32 %v402, %v517
        %v519 = vpop.f32.mrf.mxu0
        %520 = vmatprep.mubr.bf16.mxu0 0
        %521 = vmatmul.mubr.bf16.gmra.mxu0 %v435
        %v522 = vpop.f32.mrf.mxu0
        %v523 = vadd.f32 %v402, %v522
        %v524 = vpop.f32.mrf.mxu0
        %v525 = vpop.f32.mrf.mxu0
        %v526 = vadd.f32 %v402, %v525
        %v527 = vpop.f32.mrf.mxu0
        %528 = vmatprep.mubr.bf16.mxu0 0
        %529 = vmatmul.mubr.bf16.gmra.mxu0 %v438
        %v530 = vpop.f32.mrf.mxu0
        %v531 = vadd.f32 %v402, %v530
        %v532 = vpop.f32.mrf.mxu0
        %v533 = vpop.f32.mrf.mxu0
        %v534 = vadd.f32 %v402, %v533
        %v535 = vpop.f32.mrf.mxu0
        %536 = vdwg.mxu0
        %vm537 = vcmp.gt.f32.partialorder %v475, 0.0
        %vm538 = vcmp.gt.f32.partialorder %v478, 0.0
        %vm539 = vcmp.gt.f32.partialorder %v483, 0.0
        %vm540 = vcmp.gt.f32.partialorder %v486, 0.0
        %vm541 = vcmp.gt.f32.partialorder %v491, 0.0
        %vm542 = vcmp.gt.f32.partialorder %v494, 0.0
        %vm543 = vcmp.gt.f32.partialorder %v499, 0.0
        %vm544 = vcmp.gt.f32.partialorder %v502, 0.0
        %vm545 = vcmp.gt.f32.partialorder %v507, 0.0
        %vm546 = vcmp.gt.f32.partialorder %v510, 0.0
        %vm547 = vcmp.gt.f32.partialorder %v515, 0.0
        %vm548 = vcmp.gt.f32.partialorder %v518, 0.0
        %vm549 = vcmp.gt.f32.partialorder %v523, 0.0
        %vm550 = vcmp.gt.f32.partialorder %v526, 0.0
        %vm551 = vcmp.gt.f32.partialorder %v531, 0.0
        %vm552 = vcmp.gt.f32.partialorder %v534, 0.0
        %v553 = vmul.f32 %v475, 0.02
        %v554 = vmul.f32 %v478, 0.02
        %v555 = vmul.f32 %v483, 0.02
        %v556 = vmul.f32 %v486, 0.02
        %v557 = vmul.f32 %v491, 0.02
        %v558 = vmul.f32 %v494, 0.02
        %v559 = vmul.f32 %v499, 0.02
        %v560 = vmul.f32 %v502, 0.02
        %v561 = vmul.f32 %v507, 0.02
        %v562 = vmul.f32 %v510, 0.02
        %v563 = vmul.f32 %v515, 0.02
        %v564 = vmul.f32 %v518, 0.02
        %v565 = vmul.f32 %v523, 0.02
        %v566 = vmul.f32 %v526, 0.02
        %v567 = vmul.f32 %v531, 0.02
        %v568 = vmul.f32 %v534, 0.02
        %v569 = vsel %vm537, %v475, %v553
        %v570 = vsel %vm538, %v478, %v554
        %v571 = vsel %vm539, %v483, %v555
        %v572 = vsel %vm540, %v486, %v556
        %v573 = vsel %vm541, %v491, %v557
        %v574 = vsel %vm542, %v494, %v558
        %v575 = vsel %vm543, %v499, %v559
        %v576 = vsel %vm544, %v502, %v560
        %v577 = vsel %vm545, %v507, %v561
        %v578 = vsel %vm546, %v510, %v562
        %v579 = vsel %vm547, %v515, %v563
        %v580 = vsel %vm548, %v518, %v564
        %v581 = vsel %vm549, %v523, %v565
        %v582 = vsel %vm550, %v526, %v566
        %v583 = vsel %vm551, %v531, %v567
        %v584 = vsel %vm552, %v534, %v568
        %v585 = vpack.c.bf16 %v570, %v569
        %v586 = vpack.c.bf16 %v572, %v571
        %v587 = vpack.c.bf16 %v574, %v573
        %v588 = vpack.c.bf16 %v576, %v575
        %v589 = vpack.c.bf16 %v578, %v577
        %v590 = vpack.c.bf16 %v580, %v579
        %v591 = vpack.c.bf16 %v582, %v581
        %v592 = vpack.c.bf16 %v584, %v583
        %v593 = vlaneseq
        %v594 = vshrl.u32 %v593, 7
        %v595 = vsub.s32 0, %v594
        %v596 = vrot.slane %v209, %v595
        %v601 = vunpack.c.l.b16 %v201
        %v602 = vunpack.c.l.b16 %v202
        %v603 = vunpack.c.l.b16 %v203
        %v604 = vunpack.c.l.b16 %v204
        %v605 = vpack.c.b16 %v602, %v601
        %v606 = vpack.c.b16 %v604, %v603
        %v610 = vsel %vm415, %v585, 0
        %v613 = vsel %vm415, %v586, 0
        %v616 = vsel %vm415, %v587, 0
        %v619 = vsel %vm415, %v588, 0
        %v622 = vsel %vm415, %v589, 0
        %v625 = vsel %vm415, %v590, 0
        %v628 = vsel %vm415, %v591, 0
        %v631 = vsel %vm415, %v592, 0
        %633 = vmatprep.subr.bf16.mxu0 0
        %634 = vmatpush1.bf16.msra.mxu0 0
        %635 = vmatprep.subr.bf16.mxu0 0
        %636 = vmatpush1.bf16.msra.mxu0 0
        %637 = vmatprep.subr.bf16.mxu0 0
        %638 = vmatpush1.bf16.msra.mxu0 0
        %639 = vmatprep.subr.bf16.mxu0 0
        %640 = vmatpush1.bf16.msra.mxu0 0
        %641 = vmatprep.subr.bf16.mxu0 0
        %642 = vmatpush1.bf16.msra.mxu0 0
        %643 = vmatprep.subr.bf16.mxu0 0
        %644 = vmatpush1.bf16.msra.mxu0 0
        %645 = vmatprep.subr.bf16.mxu0 0
        %646 = vmatpush1.bf16.msra.mxu0 %v606
        %647 = vmatprep.subr.bf16.mxu0 0
        %648 = vmatpush1.bf16.msra.mxu0 %v605
        %649 = vmatprep.subr.bf16.mxu0 0
        %650 = vmatpush2.bf16.msra.mxu0 0
        %651 = vmatprep.subr.bf16.mxu0 0
        %652 = vmatpush2.bf16.msra.mxu0 0
        %653 = vmatprep.subr.bf16.mxu0 0
        %654 = vmatpush2.bf16.msra.mxu0 0
        %655 = vmatprep.subr.bf16.mxu0 0
        %656 = vmatpush2.bf16.msra.mxu0 0
        %657 = vmatprep.subr.bf16.mxu0 0
        %658 = vmatpush2.bf16.msra.mxu0 0
        %659 = vmatprep.subr.bf16.mxu0 0
        %660 = vmatpush2.bf16.msra.mxu0 0
        %661 = vmatprep.subr.bf16.mxu0 0
        %662 = vmatpush2.bf16.msra.mxu0 0
        %663 = vmatprep.subr.bf16.mxu0 0
        %664 = vmatpush2.bf16.msra.mxu0 0
        %665 = vmatprep.mubr.bf16.mxu0 0
        %666 = vmatmul.mubr.bf16.gmra.mxu0 %v610
        %v667 = vpop.f32.mrf.mxu0
        %v668 = vadd.f32 %v596, %v667
        %v669 = vpop.f32.mrf.mxu0
        %v670 = vpop.f32.mrf.mxu0
        %v671 = vadd.f32 %v596, %v670
        %v672 = vpop.f32.mrf.mxu0
        %673 = vmatprep.mubr.bf16.mxu0 0
        %674 = vmatmul.mubr.bf16.gmra.mxu0 %v613
        %v675 = vpop.f32.mrf.mxu0
        %v676 = vadd.f32 %v596, %v675
        %v677 = vpop.f32.mrf.mxu0
        %v678 = vpop.f32.mrf.mxu0
        %v679 = vadd.f32 %v596, %v678
        %v680 = vpop.f32.mrf.mxu0
        %681 = vmatprep.mubr.bf16.mxu0 0
        %682 = vmatmul.mubr.bf16.gmra.mxu0 %v616
        %v683 = vpop.f32.mrf.mxu0
        %v684 = vadd.f32 %v596, %v683
        %v685 = vpop.f32.mrf.mxu0
        %v686 = vpop.f32.mrf.mxu0
        %v687 = vadd.f32 %v596, %v686
        %v688 = vpop.f32.mrf.mxu0
        %689 = vmatprep.mubr.bf16.mxu0 0
        %690 = vmatmul.mubr.bf16.gmra.mxu0 %v619
        %v691 = vpop.f32.mrf.mxu0
        %v692 = vadd.f32 %v596, %v691
        %v693 = vpop.f32.mrf.mxu0
        %v694 = vpop.f32.mrf.mxu0
        %v695 = vadd.f32 %v596, %v694
        %v696 = vpop.f32.mrf.mxu0
        %697 = vmatprep.mubr.bf16.mxu0 0
        %698 = vmatmul.mubr.bf16.gmra.mxu0 %v622
        %v699 = vpop.f32.mrf.mxu0
        %v700 = vadd.f32 %v596, %v699
        %v701 = vpop.f32.mrf.mxu0
        %v702 = vpop.f32.mrf.mxu0
        %v703 = vadd.f32 %v596, %v702
        %v704 = vpop.f32.mrf.mxu0
        %705 = vmatprep.mubr.bf16.mxu0 0
        %706 = vmatmul.mubr.bf16.gmra.mxu0 %v625
        %v707 = vpop.f32.mrf.mxu0
        %v708 = vadd.f32 %v596, %v707
        %v709 = vpop.f32.mrf.mxu0
        %v710 = vpop.f32.mrf.mxu0
        %v711 = vadd.f32 %v596, %v710
        %v712 = vpop.f32.mrf.mxu0
        %713 = vmatprep.mubr.bf16.mxu0 0
        %714 = vmatmul.mubr.bf16.gmra.mxu0 %v628
        %v715 = vpop.f32.mrf.mxu0
        %v716 = vadd.f32 %v596, %v715
        %v717 = vpop.f32.mrf.mxu0
        %v718 = vpop.f32.mrf.mxu0
        %v719 = vadd.f32 %v596, %v718
        %v720 = vpop.f32.mrf.mxu0
        %721 = vmatprep.mubr.bf16.mxu0 0
        %722 = vmatmul.mubr.bf16.gmra.mxu0 %v631
        %v723 = vpop.f32.mrf.mxu0
        %v724 = vadd.f32 %v596, %v723
        %v725 = vpop.f32.mrf.mxu0
        %v726 = vpop.f32.mrf.mxu0
        %v727 = vadd.f32 %v596, %v726
        %v728 = vpop.f32.mrf.mxu0
        %729 = vdwg.mxu0
        %vm730 = vcmp.gt.f32.partialorder %v668, 0.0
        %vm731 = vcmp.gt.f32.partialorder %v671, 0.0
        %vm732 = vcmp.gt.f32.partialorder %v676, 0.0
        %vm733 = vcmp.gt.f32.partialorder %v679, 0.0
        %vm734 = vcmp.gt.f32.partialorder %v684, 0.0
        %vm735 = vcmp.gt.f32.partialorder %v687, 0.0
        %vm736 = vcmp.gt.f32.partialorder %v692, 0.0
        %vm737 = vcmp.gt.f32.partialorder %v695, 0.0
        %vm738 = vcmp.gt.f32.partialorder %v700, 0.0
        %vm739 = vcmp.gt.f32.partialorder %v703, 0.0
        %vm740 = vcmp.gt.f32.partialorder %v708, 0.0
        %vm741 = vcmp.gt.f32.partialorder %v711, 0.0
        %vm742 = vcmp.gt.f32.partialorder %v716, 0.0
        %vm743 = vcmp.gt.f32.partialorder %v719, 0.0
        %vm744 = vcmp.gt.f32.partialorder %v724, 0.0
        %vm745 = vcmp.gt.f32.partialorder %v727, 0.0
        %v746 = vmul.f32 %v668, 0.02
        %v747 = vmul.f32 %v671, 0.02
        %v748 = vmul.f32 %v676, 0.02
        %v749 = vmul.f32 %v679, 0.02
        %v750 = vmul.f32 %v684, 0.02
        %v751 = vmul.f32 %v687, 0.02
        %v752 = vmul.f32 %v692, 0.02
        %v753 = vmul.f32 %v695, 0.02
        %v754 = vmul.f32 %v700, 0.02
        %v755 = vmul.f32 %v703, 0.02
        %v756 = vmul.f32 %v708, 0.02
        %v757 = vmul.f32 %v711, 0.02
        %v758 = vmul.f32 %v716, 0.02
        %v759 = vmul.f32 %v719, 0.02
        %v760 = vmul.f32 %v724, 0.02
        %v761 = vmul.f32 %v727, 0.02
        %v762 = vsel %vm730, %v668, %v746
        %v763 = vsel %vm731, %v671, %v747
        %v764 = vsel %vm732, %v676, %v748
        %v765 = vsel %vm733, %v679, %v749
        %v766 = vsel %vm734, %v684, %v750
        %v767 = vsel %vm735, %v687, %v751
        %v768 = vsel %vm736, %v692, %v752
        %v769 = vsel %vm737, %v695, %v753
        %v770 = vsel %vm738, %v700, %v754
        %v771 = vsel %vm739, %v703, %v755
        %v772 = vsel %vm740, %v708, %v756
        %v773 = vsel %vm741, %v711, %v757
        %v774 = vsel %vm742, %v716, %v758
        %v775 = vsel %vm743, %v719, %v759
        %v776 = vsel %vm744, %v724, %v760
        %v777 = vsel %vm745, %v727, %v761
        %v778 = vpack.c.bf16 %v763, %v762
        %v779 = vpack.c.bf16 %v765, %v764
        %v780 = vpack.c.bf16 %v767, %v766
        %v781 = vpack.c.bf16 %v769, %v768
        %v782 = vpack.c.bf16 %v771, %v770
        %v783 = vpack.c.bf16 %v773, %v772
        %v784 = vpack.c.bf16 %v775, %v774
        %v785 = vpack.c.bf16 %v777, %v776
        %v788 = vunpack.c.l.b16 %v205
        %v789 = vunpack.c.l.b16 %v206
        %v790 = vpack.c.b16 %v789, %v788
        %v792 = vsel %vm415, %v790, 0
        %v795 = vsel %vm415, %v778, 0
        %v798 = vsel %vm415, %v779, 0
        %v801 = vsel %vm415, %v780, 0
        %v804 = vsel %vm415, %v781, 0
        %v807 = vsel %vm415, %v782, 0
        %v810 = vsel %vm415, %v783, 0
        %v813 = vsel %vm415, %v784, 0
        %v816 = vsel %vm415, %v785, 0
        %818 = vmatprep.subr.bf16.mxu0 0
        %819 = vmatpush1.bf16.xpose.msra.mxu0 %v816
        %820 = vmatprep.subr.bf16.mxu0 0
        %821 = vmatpush1.bf16.xpose.msra.mxu0 %v813
        %822 = vmatprep.subr.bf16.mxu0 0
        %823 = vmatpush1.bf16.xpose.msra.mxu0 %v810
        %824 = vmatprep.subr.bf16.mxu0 0
        %825 = vmatpush1.bf16.xpose.msra.mxu0 %v807
        %826 = vmatprep.subr.bf16.mxu0 0
        %827 = vmatpush1.bf16.xpose.msra.mxu0 %v804
        %828 = vmatprep.subr.bf16.mxu0 0
        %829 = vmatpush1.bf16.xpose.msra.mxu0 %v801
        %830 = vmatprep.subr.bf16.mxu0 0
        %831 = vmatpush1.bf16.xpose.msra.mxu0 %v798
        %832 = vmatprep.subr.bf16.mxu0 0
        %833 = vmatpush1.bf16.xpose.msra.mxu0 %v795
        %834 = vmatprep.subr.bf16.mxu0 0
        %835 = vmatpush2.bf16.xpose.msra.mxu0 0
        %836 = vmatprep.subr.bf16.mxu0 0
        %837 = vmatpush2.bf16.xpose.msra.mxu0 0
        %838 = vmatprep.subr.bf16.mxu0 0
        %839 = vmatpush2.bf16.xpose.msra.mxu0 0
        %840 = vmatprep.subr.bf16.mxu0 0
        %841 = vmatpush2.bf16.xpose.msra.mxu0 0
        %842 = vmatprep.subr.bf16.mxu0 0
        %843 = vmatpush2.bf16.xpose.msra.mxu0 0
        %844 = vmatprep.subr.bf16.mxu0 0
        %845 = vmatpush2.bf16.xpose.msra.mxu0 0
        %846 = vmatprep.subr.bf16.mxu0 0
        %847 = vmatpush2.bf16.xpose.msra.mxu0 0
        %848 = vmatprep.subr.bf16.mxu0 0
        %849 = vmatpush2.bf16.xpose.msra.mxu0 0
        %850 = vmatprep.mubr.bf16.mxu0 0
        %851 = vmatmul.mubr.bf16.gmra.mxu0 %v792
        %v852 = vpop.f32.mrf.mxu0
        %v853 = vadd.f32 0.0, %v852
        %v854 = vpop.f32.mrf.mxu0
        %v855 = vpop.f32.mrf.mxu0
        %v856 = vpop.f32.mrf.mxu0
        %857 = vdwg.mxu0
        %859 = vset.pattern.permute.xlu0 0
        %860 = vperm.xlu0 %859, %v210
        %v861 = vpop.permute.xlu0 %860
        %v863 = vadd.f32 %v853, %v861
        %864 = vst [vmem:[%s163] sm:$0x1] %v863
        %s865 = sand.u32 %s93, 1
        %s866 = scalar_lea.sflag [#allocation3], %s865
        %s867 = sand.u32 %s93, 1
        %s868 = scalar_lea.vmem [#allocation2], %s867
        // Predicated region
        $region33: #{tpu_custom_call.1} parent=31 // pred_check
          %p869 = pneg %p103
        $region34: #{tpu_custom_call.1} parent=31 // pred_check_branch
          %871 = sbr.rel (%p869) target = $region36
        $region35: #{tpu_custom_call.1} parent=31 // pred_region
          %s873 = ssub.s32 16, 16
          %874 = vsyncadd %s866, %s873
          %s875 = smul.addr %s17, 16
          %s876 = scalar_lea.hbm %s3, %s875
          %s878 = sshll.u32 %s868, 4
          %s879 = int_to_ptr.vmem [resolvable:$true] %s878
          %881 = dma.vmem_to_hbm [thread:$0]  %s879, 16, %s876, %s866
        $region36: #{tpu_custom_call.1} parent=31 // pred_fallthru
          _
      $region32: #{tpu_custom_call.1} parent=5 // pred_fallthru
        _
      %p882 = scmp.le.s32.totalorder 2, %s12
      // Predicated region
      $region37: #{tpu_custom_call.1} parent=5 // pred_check
        %p883 = pneg %p882
      $region38: #{tpu_custom_call.1} parent=5 // pred_check_branch
        %885 = sbr.rel (%p883) target = $region40
      $region39: #{tpu_custom_call.1} parent=5 // pred_region
        %s886 = ssub.s32 %s12, 2
        // Predicated region
        $region41: #{tpu_custom_call.1} parent=39 // pred_check
          %p887 = pneg %p109
        $region42: #{tpu_custom_call.1} parent=39 // pred_check_branch
          %889 = sbr.rel (%p887) target = $region44
        $region43: #{tpu_custom_call.1} parent=39 // pred_region
          %s890 = sand.u32 %s94, 1
          %s891 = scalar_lea.sflag [#allocation3], %s890
          %s892 = sand.u32 %s94, 1
          %s893 = scalar_lea.vmem [#allocation2], %s892
          %894 = dma.done %s891, 16
        $region44: #{tpu_custom_call.1} parent=39 // pred_fallthru
          _
      $region40: #{tpu_custom_call.1} parent=5 // pred_fallthru
        _
    $region6: #{tpu_custom_call.1} parent=1 // loop_footer
      %s16 = sadd.s32 1, %s12
    $region7: #{tpu_custom_call.1} parent=1 // loop_footer_branch
      %11 = sbr.rel target = $region3
    $region8: #{tpu_custom_call.1} parent=1 // loop_exit
      _
    %895 = vsyncpa [#allocation3], 1
    %s896 = scalar_lea.sflag [#allocation3], 1
    %897 = vsyncpa %s896, 1

</llo_original>
